<compile_context>
chip_gen: v6e
topology: v6e:2x2x1
jax: 0.10.0
libtpu: 0.0.40
codegen_flags: <defaults>
</compile_context>

<pallas_src>
import functools

import jax
import jax.numpy as jnp
from jax.experimental import pallas as pl
from jax.experimental.pallas import tpu as pltpu


def _mlp_encoder_kernel(x_ref, w1_ref, b1_ref, w2_ref, b2_ref, o_ref):
    """One batch tile: y = relu(relu(x @ W1 + b1) @ W2 + b2)."""
    h = jnp.dot(x_ref[...], w1_ref[...], preferred_element_type=jnp.float32)
    h = jnp.maximum(h + b1_ref[...], 0.0)
    y = jnp.dot(h, w2_ref[...], preferred_element_type=jnp.float32)
    y = jnp.maximum(y + b2_ref[...], 0.0)
    o_ref[...] = y.astype(o_ref.dtype)


def _block_diag(w, n):
    """[[W,0,..],[0,W,..],...] -- packs `n` independent rows into one matmul."""
    d_in, d_out = w.shape
    out = jnp.zeros((n * d_in, n * d_out), w.dtype)
    for i in range(n):
        out = out.at[i * d_in:(i + 1) * d_in, i * d_out:(i + 1) * d_out].set(w)
    return out


def pack_mlp_params(w1, b1, w2, b2, pack):
    """Block-diagonal weights / tiled biases.  Call ONCE at parameter-init time
    (hoisted out of the per-forward path per perf review)."""
    w1_p = _block_diag(w1, pack)                        # (pack*K,  pack*D1)
    w2_p = _block_diag(w2, pack)                        # (pack*D1, pack*D2)
    b1_p = jnp.tile(b1, pack).reshape(1, pack * b1.shape[0])
    b2_p = jnp.tile(b2, pack).reshape(1, pack * b2.shape[0])
    return w1_p, b1_p, w2_p, b2_p


def default_pack():
    """pack=4 on 256-wide-MXU chips (v6e/v7x), pack=2 elsewhere (v5e, v4, ...)."""
    try:
        kind = jax.devices()[0].device_kind.lower()
    except Exception:
        return 2
    if "v6" in kind or "v7" in kind:
        return 4
    return 2


def _round_up(x, m):
    return ((x + m - 1) // m) * m


def _select_row_tile(rows, block_rows, min_steps=2):
    """Large tiles to amortize per-step overhead, but >= min_steps grid steps
    whenever the batch permits (so the parallel axis uses both TCs on v7x)."""
    if rows <= 512:
        return rows                       # single full-extent block
    tb = max(512, _round_up(pl.cdiv(rows, min_steps), 256))
    return min(tb, block_rows)


def mlp_obs_encoder(obs, packed_params, *, pack, block_rows=4096,
                    out_dtype=jnp.float32):
    """Pallas forward of MLPObsEncoder.

    obs:           (B, obs_dim) float32
    packed_params: output of pack_mlp_params (block-diagonal weights, tiled biases)
    returns        (B, D2) in out_dtype
    """
    w1_p, b1_p, w2_p, b2_p = packed_params
    B, K = obs.shape
    assert w1_p.shape[0] == pack * K, "packed_params built with a different pack/obs_dim"
    D2 = w2_p.shape[1] // pack

    # --- pack `pack` consecutive batch rows into one lane-dense row ---------
    b_pad = pl.cdiv(B, pack) * pack
    x = obs if b_pad == B else jnp.pad(obs, ((0, b_pad - B), (0, 0)))
    rows = b_pad // pack
    x = x.reshape(rows, pack * K)                        # free row-major view

    # --- tile the (packed) batch dimension; ragged tail handled by Pallas ----
    tb = _select_row_tile(rows, block_rows)
    grid = (pl.cdiv(rows, tb),)          # no rows_pad: tail-block stores masked

    out_p = pl.pallas_call(
        _mlp_encoder_kernel,
        out_shape=jax.ShapeDtypeStruct((rows, pack * D2), out_dtype),
        grid_spec=pltpu.PrefetchScalarGridSpec(
            num_scalar_prefetch=0,
            grid=grid,
            in_specs=[
                pl.BlockSpec((tb, pack * K), lambda i: (i, 0)),   # batch tile
                pl.BlockSpec(w1_p.shape, lambda i: (0, 0)),       # VMEM-resident
                pl.BlockSpec(b1_p.shape, lambda i: (0, 0)),       # VMEM-resident
                pl.BlockSpec(w2_p.shape, lambda i: (0, 0)),       # VMEM-resident
                pl.BlockSpec(b2_p.shape, lambda i: (0, 0)),       # VMEM-resident
            ],
            out_specs=pl.BlockSpec((tb, pack * D2), lambda i: (i, 0)),
        ),
        compiler_params=pltpu.CompilerParams(
            dimension_semantics=("parallel",),   # shards across TCs on v7x
        ),
    )(x, w1_p, b1_p, w2_p, b2_p)

    # --- un-pack: free row-major reshape, then drop the pack padding ---------
    out = out_p.reshape(b_pad, D2)
    return out if b_pad == B else out[:B]


def init_params(key, obs_dim, hidden_dims):
    """Deterministic PyTorch-Linear-style init (uniform +/- 1/sqrt(fan_in))."""
    dims = [obs_dim] + list(hidden_dims)
    params = []
    for d_in, d_out in zip(dims[:-1], dims[1:]):
        key, kw, kb = jax.random.split(key, 3)
        bound = 1.0 / jnp.sqrt(d_in)
        # Weight stored as (in, out) == PyTorch weight (out, in) transposed.
        w = jax.random.uniform(kw, (d_in, d_out), jnp.float32, -bound, bound)
        b = jax.random.uniform(kb, (d_out,), jnp.float32, -bound, bound)
        params.append((w, b))
    return params


def _reference(obs, w1, b1, w2, b2):
    h = jnp.maximum(obs @ w1 + b1, 0.0)
    return jnp.maximum(h @ w2 + b2, 0.0)


if __name__ == "__main__":
    key = jax.random.PRNGKey(0)

    # Small shapes consistent with the module's forward.
    batch = 8
    obs_dim = 32
    ext_hidden_dims = [64, 64]   # cfg.MODEL.TRANSFORMER.EXT_HIDDEN_DIMS default

    key, k_obs = jax.random.split(key)
    obs = jax.random.normal(k_obs, (batch, obs_dim), jnp.float32)

    (w1, b1), (w2, b2) = init_params(key, obs_dim, ext_hidden_dims)

    # One-time packing at init (hoisted out of the forward path).
    pack = default_pack()
    packed = pack_mlp_params(w1, b1, w2, b2, pack)

    encoder = jax.jit(functools.partial(mlp_obs_encoder, pack=pack, block_rows=4096))
    encoder_bf16 = jax.jit(functools.partial(
        mlp_obs_encoder, pack=pack, block_rows=4096, out_dtype=jnp.bfloat16))

    # Small case (single-block grid path), exact f32 semantics.
    out = jax.block_until_ready(encoder(obs, packed))
    ref = _reference(obs, w1, b1, w2, b2)
    assert out.shape == (batch, ext_hidden_dims[-1])
    assert out.dtype == jnp.float32
    assert jnp.allclose(out, ref, atol=1e-5, rtol=1e-5)

    # Larger, non-divisible batch: exercises pack padding, the ragged multi-block
    # pipelined grid, and the parallel (megacore) batch axis.
    big_batch = 4101
    key, k_big = jax.random.split(key)
    obs_big = jax.random.normal(k_big, (big_batch, obs_dim), jnp.float32)
    out_big = jax.block_until_ready(encoder(obs_big, packed))
    ref_big = _reference(obs_big, w1, b1, w2, b2)
    assert out_big.shape == (big_batch, ext_hidden_dims[-1])
    assert jnp.allclose(out_big, ref_big, atol=1e-5, rtol=1e-5)

    # Optional bf16-output path (mem-bound kernel => ~2x fewer HBM write bytes);
    # matmuls/bias/ReLU stay f32, only the final store narrows.
    out_bf = jax.block_until_ready(encoder_bf16(obs_big, packed))
    assert out_bf.dtype == jnp.bfloat16
    assert jnp.allclose(out_bf.astype(jnp.float32), ref_big, atol=3e-2, rtol=2e-2)

    print("KERNEL_OK")
</pallas_src>

<mosaic_0001>
module attributes {stable_mosaic.version = 11 : i64} {
  func.func @_mlp_encoder_kernel(%arg0: i32, %arg1: memref<4x64xf32, #tpu.memory_space<vmem>>, %arg2: memref<64x128xf32, #tpu.memory_space<vmem>>, %arg3: memref<1x128xf32, #tpu.memory_space<vmem>>, %arg4: memref<128x128xf32, #tpu.memory_space<vmem>>, %arg5: memref<1x128xf32, #tpu.memory_space<vmem>>, %arg6: memref<4x128xf32, #tpu.memory_space<vmem>>) attributes {dimension_semantics = [#tpu.dimension_semantics<parallel>], iteration_bounds = array<i64: 1>, scalar_prefetch = 0 : i64, scratch_operands = 0 : i64, tpu.core_type = #tpu.core_type<tc>, window_params = [{transform_indices = @transform_0, window_bounds = array<i64: 4, 64>}, {pipeline_mode = #tpu.pipeline_mode<synchronous>, transform_indices = @transform_1, window_bounds = array<i64: 64, 128>}, {pipeline_mode = #tpu.pipeline_mode<synchronous>, transform_indices = @transform_2, window_bounds = array<i64: 1, 128>}, {pipeline_mode = #tpu.pipeline_mode<synchronous>, transform_indices = @transform_3, window_bounds = array<i64: 128, 128>}, {pipeline_mode = #tpu.pipeline_mode<synchronous>, transform_indices = @transform_4, window_bounds = array<i64: 1, 128>}, {transform_indices = @transform_5, window_bounds = array<i64: 4, 128>}]} {
    %c0 = arith.constant 0 : index
    %c0_0 = arith.constant 0 : index
    %0 = vector.load %arg1[%c0, %c0_0] : memref<4x64xf32, #tpu.memory_space<vmem>>, vector<4x64xf32>
    %c0_1 = arith.constant 0 : index
    %c0_2 = arith.constant 0 : index
    %1 = vector.load %arg2[%c0_1, %c0_2] : memref<64x128xf32, #tpu.memory_space<vmem>>, vector<64x128xf32>
    %cst = arith.constant dense<0.000000e+00> : vector<4x128xf32>
    %2 = tpu.matmul %0, %1, %cst {dimension_numbers = #tpu.dot_dimension_numbers<[1], [0], [0], [1], [0, 0, 1, 1], [], []>} : vector<4x64xf32>, vector<64x128xf32>, vector<4x128xf32> -> vector<4x128xf32>
    %c0_3 = arith.constant 0 : index
    %c0_4 = arith.constant 0 : index
    %3 = vector.load %arg3[%c0_3, %c0_4] : memref<1x128xf32, #tpu.memory_space<vmem>>, vector<1x128xf32>
    %4 = vector.broadcast %3 : vector<1x128xf32> to vector<4x128xf32>
    %5 = arith.addf %2, %4 : vector<4x128xf32>
    %cst_5 = arith.constant 0.000000e+00 : f32
    %6 = vector.broadcast %cst_5 : f32 to vector<4x128xf32>
    %7 = arith.maximumf %5, %6 : vector<4x128xf32>
    %c0_6 = arith.constant 0 : index
    %c0_7 = arith.constant 0 : index
    %8 = vector.load %arg4[%c0_6, %c0_7] : memref<128x128xf32, #tpu.memory_space<vmem>>, vector<128x128xf32>
    %cst_8 = arith.constant dense<0.000000e+00> : vector<4x128xf32>
    %9 = tpu.matmul %7, %8, %cst_8 {dimension_numbers = #tpu.dot_dimension_numbers<[1], [0], [0], [1], [0, 0, 1, 1], [], []>} : vector<4x128xf32>, vector<128x128xf32>, vector<4x128xf32> -> vector<4x128xf32>
    %c0_9 = arith.constant 0 : index
    %c0_10 = arith.constant 0 : index
    %10 = vector.load %arg5[%c0_9, %c0_10] : memref<1x128xf32, #tpu.memory_space<vmem>>, vector<1x128xf32>
    %11 = vector.broadcast %10 : vector<1x128xf32> to vector<4x128xf32>
    %12 = arith.addf %9, %11 : vector<4x128xf32>
    %cst_11 = arith.constant 0.000000e+00 : f32
    %13 = vector.broadcast %cst_11 : f32 to vector<4x128xf32>
    %14 = arith.maximumf %12, %13 : vector<4x128xf32>
    %c0_12 = arith.constant 0 : index
    %c0_13 = arith.constant 0 : index
    %15 = vector.load %arg6[%c0_12, %c0_13] : memref<4x128xf32, #tpu.memory_space<vmem>>, vector<4x128xf32>
    tpu.vector_store %arg6[%c0_12, %c0_13], %14 {strides = array<i32>} : memref<4x128xf32, #tpu.memory_space<vmem>>, vector<4x128xf32>,
    return
  }
  func.func @transform_0(%arg0: i32) -> (i32, i32) {
    %c0_i32 = arith.constant 0 : i32
    %c0_i32_0 = arith.constant 0 : i32
    return %arg0, %c0_i32 : i32, i32
  }
  func.func @transform_1(%arg0: i32) -> (i32, i32) {
    %c0_i32 = arith.constant 0 : i32
    %c0_i32_0 = arith.constant 0 : i32
    %c0_i32_1 = arith.constant 0 : i32
    return %c0_i32, %c0_i32_0 : i32, i32
  }
  func.func @transform_2(%arg0: i32) -> (i32, i32) {
    %c0_i32 = arith.constant 0 : i32
    %c0_i32_0 = arith.constant 0 : i32
    %c0_i32_1 = arith.constant 0 : i32
    return %c0_i32, %c0_i32_0 : i32, i32
  }
  func.func @transform_3(%arg0: i32) -> (i32, i32) {
    %c0_i32 = arith.constant 0 : i32
    %c0_i32_0 = arith.constant 0 : i32
    %c0_i32_1 = arith.constant 0 : i32
    return %c0_i32, %c0_i32_0 : i32, i32
  }
  func.func @transform_4(%arg0: i32) -> (i32, i32) {
    %c0_i32 = arith.constant 0 : i32
    %c0_i32_0 = arith.constant 0 : i32
    %c0_i32_1 = arith.constant 0 : i32
    return %c0_i32, %c0_i32_0 : i32, i32
  }
  func.func @transform_5(%arg0: i32) -> (i32, i32) {
    %c0_i32 = arith.constant 0 : i32
    %c0_i32_0 = arith.constant 0 : i32
    return %arg0, %c0_i32 : i32, i32
  }
}

</mosaic_0001>

<llo_original>
// kernel: mlp_obs_encoder.1
$region0: #{mlp_obs_encoder.1}
  #allocation0 [shape = 'u32[]', space=smem, size = 0x4, offset = 0x4, fixed_abs, tag = 'smem constant byte address 0x4 - core index']
  #allocation1 [shape = 'u32[144,128]{1,0:T(1,128)}', space=vmem, size = 0x12000, scoped, tag = 'internal scratch']
  %s0 = inlined_call_operand.vmem [shape: f32[4,64], index: 0, kind: input, shape index: {}]
  %s1 = inlined_call_operand.hbm [shape: f32[64,128], index: 1, kind: input, shape index: {}]
  %s2 = inlined_call_operand.vmem [shape: f32[1,128], index: 2, kind: input, shape index: {}]
  %s3 = inlined_call_operand.hbm [shape: f32[128,128], index: 3, kind: input, shape index: {}]
  %s4 = inlined_call_operand.vmem [shape: f32[1,128], index: 4, kind: input, shape index: {}]
  %s5 = inlined_call_operand.vmem [shape: f32[4,128], index: 5, kind: output, shape index: {}]
  %s6 = sld [smem:[#allocation0]]
  $region38: #{mlp_obs_encoder.1} parent=0
    _
  %s8 = ssub.s32 1, %s6
  %s9 = scalar_select 0, %s8, %s6
  $region1: #{mlp_obs_encoder.1} parent=0
    #allocation2 [shape = 'u8[32768]{0}', space=vmem, size = 0x8000, scoped, tag = 'input window, operand 1, single buffered']
    #allocation3 [shape = 's32[1]{0}', space=sflag, size = 0x4, scoped, tag = 'scoped memory for mlp_obs_encoder.1']
    #allocation4 [shape = 'u8[65536]{0}', space=vmem, size = 0x10000, scoped, tag = 'input window, operand 3, single buffered']
    #allocation5 [shape = 's32[1]{0}', space=sflag, size = 0x4, scoped, tag = 'scoped memory for mlp_obs_encoder.1']
    %10 = vsyncpa [#allocation3], 0
    %11 = vsyncpa [#allocation5], 0
    // Predicated region
    $region2: #{mlp_obs_encoder.1} parent=1 // pred_check
      _
    $region3: #{mlp_obs_encoder.1} parent=1 // pred_check_branch
      %13 = sbr.rel (0) target = $region5
    $region4: #{mlp_obs_encoder.1} parent=1 // pred_region
      _
    $region5: #{mlp_obs_encoder.1} parent=1 // pred_fallthru
      _
    // Predicated region
    $region6: #{mlp_obs_encoder.1} parent=1 // pred_check
      _
    $region7: #{mlp_obs_encoder.1} parent=1 // pred_check_branch
      %15 = sbr.rel (0) target = $region9
    $region8: #{mlp_obs_encoder.1} parent=1 // pred_region
      %s17 = ssub.s32 1024, 1024
      %18 = vsyncadd [#allocation3], %s17
      %s19 = sshll.u32 [#allocation2], 4
      %s20 = int_to_ptr.vmem [resolvable:$true] %s19
      %25 = dma.hbm_to_vmem [thread:$0]  %s1, 1024, %s20, [#allocation3], 128, 128, 8
    $region9: #{mlp_obs_encoder.1} parent=1 // pred_fallthru
      _
    // Predicated region
    $region10: #{mlp_obs_encoder.1} parent=1 // pred_check
      _
    $region11: #{mlp_obs_encoder.1} parent=1 // pred_check_branch
      %27 = sbr.rel (0) target = $region13
    $region12: #{mlp_obs_encoder.1} parent=1 // pred_region
      _
    $region13: #{mlp_obs_encoder.1} parent=1 // pred_fallthru
      _
    // Predicated region
    $region14: #{mlp_obs_encoder.1} parent=1 // pred_check
      _
    $region15: #{mlp_obs_encoder.1} parent=1 // pred_check_branch
      %29 = sbr.rel (0) target = $region17
    $region16: #{mlp_obs_encoder.1} parent=1 // pred_region
      %s31 = ssub.s32 2048, 2048
      %32 = vsyncadd [#allocation5], %s31
      %s33 = sshll.u32 [#allocation4], 4
      %s34 = int_to_ptr.vmem [resolvable:$true] %s33
      %39 = dma.hbm_to_vmem [thread:$0]  %s3, 2048, %s34, [#allocation5], 128, 128, 8
    $region17: #{mlp_obs_encoder.1} parent=1 // pred_fallthru
      _
    // Predicated region
    $region18: #{mlp_obs_encoder.1} parent=1 // pred_check
      _
    $region19: #{mlp_obs_encoder.1} parent=1 // pred_check_branch
      %41 = sbr.rel (0) target = $region21
    $region20: #{mlp_obs_encoder.1} parent=1 // pred_region
      _
    $region21: #{mlp_obs_encoder.1} parent=1 // pred_fallthru
      _
    // Predicated region
    $region22: #{mlp_obs_encoder.1} parent=1 // pred_check
      _
    $region23: #{mlp_obs_encoder.1} parent=1 // pred_check_branch
      %43 = sbr.rel (0) target = $region25
    $region24: #{mlp_obs_encoder.1} parent=1 // pred_region
      %44 = dma.done [#allocation3], 1024
    $region25: #{mlp_obs_encoder.1} parent=1 // pred_fallthru
      _
    // Predicated region
    $region26: #{mlp_obs_encoder.1} parent=1 // pred_check
      _
    $region27: #{mlp_obs_encoder.1} parent=1 // pred_check_branch
      %46 = sbr.rel (0) target = $region29
    $region28: #{mlp_obs_encoder.1} parent=1 // pred_region
      %47 = dma.done [#allocation5], 2048
    $region29: #{mlp_obs_encoder.1} parent=1 // pred_fallthru
      _
    %v48 = vld [vmem:[%s0] sm:$0xf]
    %v49 = vld [vmem:[#allocation2] sm:$0xff]
    %v50 = vld [vmem:[#allocation2 + $0x8] sm:$0xff]
    %v51 = vld [vmem:[#allocation2 + $0x10] sm:$0xff]
    %v52 = vld [vmem:[#allocation2 + $0x18] sm:$0xff]
    %v53 = vld [vmem:[#allocation2 + $0x20] sm:$0xff]
    %v54 = vld [vmem:[#allocation2 + $0x28] sm:$0xff]
    %v55 = vld [vmem:[#allocation2 + $0x30] sm:$0xff]
    %v56 = vld [vmem:[#allocation2 + $0x38] sm:$0xff]
    %v57 = vld [vmem:[%s2] sm:$0x1]
    %v59 = vlaneseq
    %v60 = vshrl.u32 %v59, 7
    %v61 = vsub.s32 0, %v60
    %v62 = vrot.slane %v57, %v61
    %vm64 = vcmask 523264
    %v66 = vsel %vm64, %v48, 0
    %68 = vmatprep.subr.mxu0 0.0
    %69 = vmatpush1.msra.mxu0 0.0
    %70 = vmatprep.subr.mxu0 0.0
    %71 = vmatpush1.msra.mxu0 0.0
    %72 = vmatprep.subr.mxu0 0.0
    %73 = vmatpush1.msra.mxu0 0.0
    %74 = vmatprep.subr.mxu0 0.0
    %75 = vmatpush1.msra.mxu0 0.0
    %76 = vmatprep.subr.mxu0 0.0
    %77 = vmatpush1.msra.mxu0 0.0
    %78 = vmatprep.subr.mxu0 0.0
    %79 = vmatpush1.msra.mxu0 0.0
    %80 = vmatprep.subr.mxu0 0.0
    %81 = vmatpush1.msra.mxu0 0.0
    %82 = vmatprep.subr.mxu0 0.0
    %83 = vmatpush1.msra.mxu0 0.0
    %84 = vmatprep.subr.mxu0 0.0
    %85 = vmatpush1.msra.mxu0 %v56
    %86 = vmatprep.subr.mxu0 0.0
    %87 = vmatpush1.msra.mxu0 %v55
    %88 = vmatprep.subr.mxu0 0.0
    %89 = vmatpush1.msra.mxu0 %v54
    %90 = vmatprep.subr.mxu0 0.0
    %91 = vmatpush1.msra.mxu0 %v53
    %92 = vmatprep.subr.mxu0 0.0
    %93 = vmatpush1.msra.mxu0 %v52
    %94 = vmatprep.subr.mxu0 0.0
    %95 = vmatpush1.msra.mxu0 %v51
    %96 = vmatprep.subr.mxu0 0.0
    %97 = vmatpush1.msra.mxu0 %v50
    %98 = vmatprep.subr.mxu0 0.0
    %99 = vmatpush1.msra.mxu0 %v49
    %100 = vmatprep.subr.mxu0 0.0
    %101 = vmatpush2.msra.mxu0 0.0
    %102 = vmatprep.subr.mxu0 0.0
    %103 = vmatpush2.msra.mxu0 0.0
    %104 = vmatprep.subr.mxu0 0.0
    %105 = vmatpush2.msra.mxu0 0.0
    %106 = vmatprep.subr.mxu0 0.0
    %107 = vmatpush2.msra.mxu0 0.0
    %108 = vmatprep.subr.mxu0 0.0
    %109 = vmatpush2.msra.mxu0 0.0
    %110 = vmatprep.subr.mxu0 0.0
    %111 = vmatpush2.msra.mxu0 0.0
    %112 = vmatprep.subr.mxu0 0.0
    %113 = vmatpush2.msra.mxu0 0.0
    %114 = vmatprep.subr.mxu0 0.0
    %115 = vmatpush2.msra.mxu0 0.0
    %116 = vmatprep.subr.mxu0 0.0
    %117 = vmatpush2.msra.mxu0 0.0
    %118 = vmatprep.subr.mxu0 0.0
    %119 = vmatpush2.msra.mxu0 0.0
    %120 = vmatprep.subr.mxu0 0.0
    %121 = vmatpush2.msra.mxu0 0.0
    %122 = vmatprep.subr.mxu0 0.0
    %123 = vmatpush2.msra.mxu0 0.0
    %124 = vmatprep.subr.mxu0 0.0
    %125 = vmatpush2.msra.mxu0 0.0
    %126 = vmatprep.subr.mxu0 0.0
    %127 = vmatpush2.msra.mxu0 0.0
    %128 = vmatprep.subr.mxu0 0.0
    %129 = vmatpush2.msra.mxu0 0.0
    %130 = vmatprep.subr.mxu0 0.0
    %131 = vmatpush2.msra.mxu0 0.0
    %132 = vmatprep.mubr.f32.mxu0 0.0
    %133 = vmatmul.mubr.f32.gmra.mxu0 %v66
    %v134 = vpop.f32.mrf.mxu0
    %v135 = vadd.f32 %v62, %v134
    %v136 = vpop.f32.mrf.mxu0
    %137 = vdwg.mxu0
    %v138 = vmax.f32 %v135, 0.0
    %v139 = vld [vmem:[#allocation4] sm:$0xff]
    %v140 = vld [vmem:[#allocation4 + $0x8] sm:$0xff]
    %v141 = vld [vmem:[#allocation4 + $0x10] sm:$0xff]
    %v142 = vld [vmem:[#allocation4 + $0x18] sm:$0xff]
    %v143 = vld [vmem:[#allocation4 + $0x20] sm:$0xff]
    %v144 = vld [vmem:[#allocation4 + $0x28] sm:$0xff]
    %v145 = vld [vmem:[#allocation4 + $0x30] sm:$0xff]
    %v146 = vld [vmem:[#allocation4 + $0x38] sm:$0xff]
    %v147 = vld [vmem:[#allocation4 + $0x40] sm:$0xff]
    %v148 = vld [vmem:[#allocation4 + $0x48] sm:$0xff]
    %v149 = vld [vmem:[#allocation4 + $0x50] sm:$0xff]
    %v150 = vld [vmem:[#allocation4 + $0x58] sm:$0xff]
    %v151 = vld [vmem:[#allocation4 + $0x60] sm:$0xff]
    %v152 = vld [vmem:[#allocation4 + $0x68] sm:$0xff]
    %v153 = vld [vmem:[#allocation4 + $0x70] sm:$0xff]
    %v154 = vld [vmem:[#allocation4 + $0x78] sm:$0xff]
    %v155 = vld [vmem:[%s4] sm:$0x1]
    %v157 = vlaneseq
    %v158 = vshrl.u32 %v157, 7
    %v159 = vsub.s32 0, %v158
    %v160 = vrot.slane %v155, %v159
    %162 = vmatprep.subr.mxu0 0.0
    %163 = vmatpush1.msra.mxu0 %v154
    %164 = vmatprep.subr.mxu0 0.0
    %165 = vmatpush1.msra.mxu0 %v153
    %166 = vmatprep.subr.mxu0 0.0
    %167 = vmatpush1.msra.mxu0 %v152
    %168 = vmatprep.subr.mxu0 0.0
    %169 = vmatpush1.msra.mxu0 %v151
    %170 = vmatprep.subr.mxu0 0.0
    %171 = vmatpush1.msra.mxu0 %v150
    %172 = vmatprep.subr.mxu0 0.0
    %173 = vmatpush1.msra.mxu0 %v149
    %174 = vmatprep.subr.mxu0 0.0
    %175 = vmatpush1.msra.mxu0 %v148
    %176 = vmatprep.subr.mxu0 0.0
    %177 = vmatpush1.msra.mxu0 %v147
    %178 = vmatprep.subr.mxu0 0.0
    %179 = vmatpush1.msra.mxu0 %v146
    %180 = vmatprep.subr.mxu0 0.0
    %181 = vmatpush1.msra.mxu0 %v145
    %182 = vmatprep.subr.mxu0 0.0
    %183 = vmatpush1.msra.mxu0 %v144
    %184 = vmatprep.subr.mxu0 0.0
    %185 = vmatpush1.msra.mxu0 %v143
    %186 = vmatprep.subr.mxu0 0.0
    %187 = vmatpush1.msra.mxu0 %v142
    %188 = vmatprep.subr.mxu0 0.0
    %189 = vmatpush1.msra.mxu0 %v141
    %190 = vmatprep.subr.mxu0 0.0
    %191 = vmatpush1.msra.mxu0 %v140
    %192 = vmatprep.subr.mxu0 0.0
    %193 = vmatpush1.msra.mxu0 %v139
    %194 = vmatprep.subr.mxu0 0.0
    %195 = vmatpush2.msra.mxu0 0.0
    %196 = vmatprep.subr.mxu0 0.0
    %197 = vmatpush2.msra.mxu0 0.0
    %198 = vmatprep.subr.mxu0 0.0
    %199 = vmatpush2.msra.mxu0 0.0
    %200 = vmatprep.subr.mxu0 0.0
    %201 = vmatpush2.msra.mxu0 0.0
    %202 = vmatprep.subr.mxu0 0.0
    %203 = vmatpush2.msra.mxu0 0.0
    %204 = vmatprep.subr.mxu0 0.0
    %205 = vmatpush2.msra.mxu0 0.0
    %206 = vmatprep.subr.mxu0 0.0
    %207 = vmatpush2.msra.mxu0 0.0
    %208 = vmatprep.subr.mxu0 0.0
    %209 = vmatpush2.msra.mxu0 0.0
    %210 = vmatprep.subr.mxu0 0.0
    %211 = vmatpush2.msra.mxu0 0.0
    %212 = vmatprep.subr.mxu0 0.0
    %213 = vmatpush2.msra.mxu0 0.0
    %214 = vmatprep.subr.mxu0 0.0
    %215 = vmatpush2.msra.mxu0 0.0
    %216 = vmatprep.subr.mxu0 0.0
    %217 = vmatpush2.msra.mxu0 0.0
    %218 = vmatprep.subr.mxu0 0.0
    %219 = vmatpush2.msra.mxu0 0.0
    %220 = vmatprep.subr.mxu0 0.0
    %221 = vmatpush2.msra.mxu0 0.0
    %222 = vmatprep.subr.mxu0 0.0
    %223 = vmatpush2.msra.mxu0 0.0
    %224 = vmatprep.subr.mxu0 0.0
    %225 = vmatpush2.msra.mxu0 0.0
    %226 = vmatprep.mubr.f32.mxu0 0.0
    %227 = vmatmul.mubr.f32.gmra.mxu0 %v138
    %v228 = vpop.f32.mrf.mxu0
    %v229 = vadd.f32 %v160, %v228
    %v230 = vpop.f32.mrf.mxu0
    %231 = vdwg.mxu0
    %v232 = vmax.f32 %v229, 0.0
    %233 = vst [vmem:[%s5] sm:$0xf] %v232
    // Predicated region
    $region30: #{mlp_obs_encoder.1} parent=1 // pred_check
      _
    $region31: #{mlp_obs_encoder.1} parent=1 // pred_check_branch
      %235 = sbr.rel (0) target = $region33
    $region32: #{mlp_obs_encoder.1} parent=1 // pred_region
      _
    $region33: #{mlp_obs_encoder.1} parent=1 // pred_fallthru
      _
    // Predicated region
    $region34: #{mlp_obs_encoder.1} parent=1 // pred_check
      _
    $region35: #{mlp_obs_encoder.1} parent=1 // pred_check_branch
      %237 = sbr.rel (0) target = $region37
    $region36: #{mlp_obs_encoder.1} parent=1 // pred_region
      _
    $region37: #{mlp_obs_encoder.1} parent=1 // pred_fallthru
      _
    %238 = vsyncpa [#allocation3], 1
    %239 = vsyncpa [#allocation5], 1

</llo_original>
